<compile_context>
chip_gen: v7x
topology: tpu7x:2x2x1
jax: 0.10.0
libtpu: 0.0.40
codegen_flags: <defaults>
</compile_context>

<pallas_src>
import jax
import jax.numpy as jnp
from jax.experimental import pallas as pl
from jax.experimental.pallas import tpu as pltpu


def _round_up(x, m):
    return ((x + m - 1) // m) * m


def _choose_tile_b(B):
    """Pick the batch tile.

    Big enough to amortize the ~0.35 us per-grid-step overhead, capped at 512
    so live (num_neurons, tile_b) f32 activations stay inside the vreg file,
    and for small batches sized so the grid count is even and >= 2 (v7x has 2
    TensorCores; an odd/unit grid leaves one idle).
    """
    tile_b = min(512, _round_up(max(B, 1), 128))
    if B > 128 and _round_up(B, tile_b) // tile_b == 1:
        tile_b = _round_up(-(-B // 2), 128)      # split into 2 lane-dense tiles
    return tile_b


def mlp_kernel(x_ref, *refs):
    """refs = (w0, b0, w1, b1, ..., wL, bL, out_ref).

    Layout: activations are (features, batch_tile) so batch rides the 128-wide
    lane axis (every store is lane-dense).  Weights keep the PyTorch nn.Linear
    layout (fan_out, fan_in) and may be bf16 (opt-in); biases are (fan_out, 1)
    f32 broadcast over lanes.  tanh after every layer except layer_output.
    """
    o_ref = refs[-1]
    wb = refs[:-1]
    n_layers = len(wb) // 2

    h = x_ref[...].astype(jnp.float32)              # (fan_in0, TB)
    for i in range(n_layers):
        w = wb[2 * i][...]                          # (fan_out, fan_in)
        b = wb[2 * i + 1][...]                      # (fan_out, 1), f32
        fan_out, fan_in = w.shape
        if fan_in <= 8:
            # Tiny-K layer (the (x, t) input layer): VPU broadcast FMAs, skip
            # a nearly-empty MXU tile.
            wf = w.astype(jnp.float32)
            acc = wf[:, 0:1] * h[0:1, :]            # (fan_out,1)*(1,TB)->(fan_out,TB)
            for k in range(1, fan_in):
                acc = acc + wf[:, k : k + 1] * h[k : k + 1, :]
            hn = acc + b
        else:
            # MXU path: operands may be bf16 (v6e/v7x opt-in), f32 accumulate.
            hn = jnp.dot(w, h.astype(w.dtype),
                         preferred_element_type=jnp.float32) + b
        if i < n_layers - 1:                        # no activation on layer_output
            # f32 tanh; single EUP slot is the likely ceiling once tiles are
            # large -- would switch to a VALU polynomial only if the bundle
            # dump shows EUP as the critical unit.
            hn = jnp.tanh(hn)
        h = hn
    o_ref[...] = h.astype(jnp.float32)              # explicit f32 store


def mlp_forward(x, params, *, tile_b=None, mxu_bf16=False):
    """x: (B, in_features); params: list of (W (fan_out, fan_in), b (fan_out, 1)).

    mxu_bf16=True casts the >8-fan_in weights (and, in-kernel, the matching
    activations) to bf16 for the MXU while accumulating in f32 -- fewer MXU
    passes and lower vreg pressure on v6e/v7x at ~1e-2 relative error.
    """
    B, in_features = x.shape
    out_features = params[-1][0].shape[0]

    if tile_b is None:
        tile_b = _choose_tile_b(B)
    tile_b = _round_up(tile_b, 128)                 # lane-dense output tiles
    b_pad = _round_up(B, tile_b)

    # Fused pad + transpose: batch goes to the lane axis in one HBM pass.
    x_t = jnp.pad(x.astype(jnp.float32).T, ((0, 0), (0, b_pad - B)))

    flat = []
    in_specs = [pl.BlockSpec((in_features, tile_b), lambda i: (0, i))]
    for w, b in params:
        fan_out, fan_in = w.shape
        w_use = (w.astype(jnp.bfloat16)
                 if (mxu_bf16 and fan_in > 8) else w.astype(jnp.float32))
        flat += [w_use, b.astype(jnp.float32)]
        # Constant index_map -> weights/biases stay resident in VMEM.
        in_specs.append(pl.BlockSpec((fan_out, fan_in), lambda i: (0, 0)))
        in_specs.append(pl.BlockSpec((fan_out, 1), lambda i: (0, 0)))

    # Advisory cost estimate for the surrounding XLA schedule.
    flops = 0
    transc = 0
    bytes_accessed = 4 * (x_t.size + out_features * b_pad)
    for li, (w, b) in enumerate(params):
        fan_out, fan_in = w.shape
        flops += 2 * b_pad * fan_in * fan_out
        if li < len(params) - 1:
            transc += b_pad * fan_out
        bytes_accessed += 4 * (w.size + b.size)

    out_t = pl.pallas_call(
        mlp_kernel,
        out_shape=jax.ShapeDtypeStruct((out_features, b_pad), jnp.float32),
        grid=(b_pad // tile_b,),
        in_specs=in_specs,
        out_specs=pl.BlockSpec((out_features, tile_b), lambda i: (0, i)),
        compiler_params=pltpu.CompilerParams(dimension_semantics=("parallel",)),
        cost_estimate=pl.CostEstimate(
            flops=int(flops),
            transcendentals=int(transc),
            bytes_accessed=int(bytes_accessed),
        ),
    )(x_t, *flat)

    return out_t.T[:B]                              # back to (B, out_features)


def init_mlp_params(key, in_features, out_features, num_layers, num_neurons):
    """Deterministic init matching nn.Linear default (uniform +-1/sqrt(fan_in)).

    Weights in PyTorch layout (fan_out, fan_in); biases as (fan_out, 1).
    """
    dims = [in_features] + [num_neurons] * num_layers + [out_features]
    params = []
    for fan_in, fan_out in zip(dims[:-1], dims[1:]):
        key, kw, kb = jax.random.split(key, 3)
        bound = 1.0 / float(fan_in) ** 0.5
        w = jax.random.uniform(kw, (fan_out, fan_in), jnp.float32, -bound, bound)
        b = jax.random.uniform(kb, (fan_out, 1), jnp.float32, -bound, bound)
        params.append((w, b))
    return params


def mlp_reference(x, params):
    """Pure-JAX reference (mirrors the PyTorch MLP.forward)."""
    h = x
    for i, (w, b) in enumerate(params):
        h = jnp.dot(h, w.T, precision=jax.lax.Precision.HIGHEST) + b[:, 0]
        if i < len(params) - 1:
            h = jnp.tanh(h)
    return h


if __name__ == "__main__":
    # Burgers PINN-style MLP: inputs (x, t) -> scalar u.
    in_features = 2
    out_features = 1
    num_layers = 4       # layer_input + 3 hidden layers + layer_output
    num_neurons = 32

    key = jax.random.PRNGKey(0)
    key, kp = jax.random.split(key)
    params = init_mlp_params(kp, in_features, out_features, num_layers, num_neurons)

    # Case 1: batch not a multiple of the tile; auto-tiling picks tile_b=256 ->
    # an even 2-step grid (both v7x TCs busy) with the pad sliced off.
    key, kx = jax.random.split(key)
    x1 = jax.random.normal(kx, (300, in_features), jnp.float32)
    o1 = jax.block_until_ready(mlp_forward(x1, params))
    r1 = mlp_reference(x1, params)
    assert o1.shape == (300, out_features)
    assert jnp.allclose(o1, r1, atol=1e-4, rtol=1e-4), float(jnp.max(jnp.abs(o1 - r1)))

    # Case 2: larger batch -> auto tile_b=512 (vreg-pressure cap), grid=2.
    key, kx = jax.random.split(key)
    x2 = jax.random.normal(kx, (1000, in_features), jnp.float32)
    o2 = jax.block_until_ready(mlp_forward(x2, params))
    r2 = mlp_reference(x2, params)
    assert o2.shape == (1000, out_features)
    assert jnp.allclose(o2, r2, atol=1e-4, rtol=1e-4), float(jnp.max(jnp.abs(o2 - r2)))

    # Case 3: opt-in bf16 MXU operands with f32 accumulation (v6e/v7x path).
    o3 = jax.block_until_ready(mlp_forward(x2, params, mxu_bf16=True))
    assert jnp.allclose(o3, r2, atol=5e-2, rtol=5e-2), float(jnp.max(jnp.abs(o3 - r2)))

    print("KERNEL_OK")
</pallas_src>

<mosaic_0001>
module attributes {stable_mosaic.version = 11 : i64} {
  func.func @mlp_kernel(%arg0: i32, %arg1: memref<2x256xf32, #tpu.memory_space<vmem>>, %arg2: memref<32x2xf32, #tpu.memory_space<vmem>>, %arg3: memref<32x1xf32, #tpu.memory_space<vmem>>, %arg4: memref<32x32xf32, #tpu.memory_space<vmem>>, %arg5: memref<32x1xf32, #tpu.memory_space<vmem>>, %arg6: memref<32x32xf32, #tpu.memory_space<vmem>>, %arg7: memref<32x1xf32, #tpu.memory_space<vmem>>, %arg8: memref<32x32xf32, #tpu.memory_space<vmem>>, %arg9: memref<32x1xf32, #tpu.memory_space<vmem>>, %arg10: memref<1x32xf32, #tpu.memory_space<vmem>>, %arg11: memref<1x1xf32, #tpu.memory_space<vmem>>, %arg12: memref<1x256xf32, #tpu.memory_space<vmem>>) attributes {dimension_semantics = [#tpu.dimension_semantics<parallel>], iteration_bounds = array<i64: 2>, scalar_prefetch = 0 : i64, scratch_operands = 0 : i64, tpu.core_type = #tpu.core_type<tc>, window_params = [{transform_indices = @transform_0, window_bounds = array<i64: 2, 256>}, {pipeline_mode = #tpu.pipeline_mode<synchronous>, transform_indices = @transform_1, window_bounds = array<i64: 32, 2>}, {pipeline_mode = #tpu.pipeline_mode<synchronous>, transform_indices = @transform_2, window_bounds = array<i64: 32, 1>}, {pipeline_mode = #tpu.pipeline_mode<synchronous>, transform_indices = @transform_3, window_bounds = array<i64: 32, 32>}, {pipeline_mode = #tpu.pipeline_mode<synchronous>, transform_indices = @transform_4, window_bounds = array<i64: 32, 1>}, {pipeline_mode = #tpu.pipeline_mode<synchronous>, transform_indices = @transform_5, window_bounds = array<i64: 32, 32>}, {pipeline_mode = #tpu.pipeline_mode<synchronous>, transform_indices = @transform_6, window_bounds = array<i64: 32, 1>}, {pipeline_mode = #tpu.pipeline_mode<synchronous>, transform_indices = @transform_7, window_bounds = array<i64: 32, 32>}, {pipeline_mode = #tpu.pipeline_mode<synchronous>, transform_indices = @transform_8, window_bounds = array<i64: 32, 1>}, {pipeline_mode = #tpu.pipeline_mode<synchronous>, transform_indices = @transform_9, window_bounds = array<i64: 1, 32>}, {pipeline_mode = #tpu.pipeline_mode<synchronous>, transform_indices = @transform_10, window_bounds = array<i64: 1, 1>}, {transform_indices = @transform_11, window_bounds = array<i64: 1, 256>}]} {
    %c0 = arith.constant 0 : index
    %c0_0 = arith.constant 0 : index
    %0 = vector.load %arg1[%c0, %c0_0] : memref<2x256xf32, #tpu.memory_space<vmem>>, vector<2x256xf32>
    %c0_1 = arith.constant 0 : index
    %c0_2 = arith.constant 0 : index
    %1 = vector.load %arg2[%c0_1, %c0_2] : memref<32x2xf32, #tpu.memory_space<vmem>>, vector<32x2xf32>
    %c0_3 = arith.constant 0 : index
    %c0_4 = arith.constant 0 : index
    %2 = vector.load %arg3[%c0_3, %c0_4] : memref<32x1xf32, #tpu.memory_space<vmem>>, vector<32x1xf32>
    %3 = vector.extract_strided_slice %1 {offsets = [0, 0], sizes = [32, 1], strides = [1, 1]} : vector<32x2xf32> to vector<32x1xf32>
    %4 = vector.extract_strided_slice %0 {offsets = [0, 0], sizes = [1, 256], strides = [1, 1]} : vector<2x256xf32> to vector<1x256xf32>
    %5 = vector.broadcast %3 : vector<32x1xf32> to vector<32x256xf32>
    %6 = vector.broadcast %4 : vector<1x256xf32> to vector<32x256xf32>
    %7 = arith.mulf %5, %6 : vector<32x256xf32>
    %8 = vector.extract_strided_slice %1 {offsets = [0, 1], sizes = [32, 1], strides = [1, 1]} : vector<32x2xf32> to vector<32x1xf32>
    %9 = vector.extract_strided_slice %0 {offsets = [1, 0], sizes = [1, 256], strides = [1, 1]} : vector<2x256xf32> to vector<1x256xf32>
    %10 = vector.broadcast %8 : vector<32x1xf32> to vector<32x256xf32>
    %11 = vector.broadcast %9 : vector<1x256xf32> to vector<32x256xf32>
    %12 = arith.mulf %10, %11 : vector<32x256xf32>
    %13 = arith.addf %7, %12 : vector<32x256xf32>
    %14 = vector.broadcast %2 : vector<32x1xf32> to vector<32x256xf32>
    %15 = arith.addf %13, %14 : vector<32x256xf32>
    %16 = math.tanh %15 : vector<32x256xf32>
    %c0_5 = arith.constant 0 : index
    %c0_6 = arith.constant 0 : index
    %17 = vector.load %arg4[%c0_5, %c0_6] : memref<32x32xf32, #tpu.memory_space<vmem>>, vector<32x32xf32>
    %c0_7 = arith.constant 0 : index
    %c0_8 = arith.constant 0 : index
    %18 = vector.load %arg5[%c0_7, %c0_8] : memref<32x1xf32, #tpu.memory_space<vmem>>, vector<32x1xf32>
    %cst = arith.constant dense<0.000000e+00> : vector<32x256xf32>
    %19 = tpu.matmul %17, %16, %cst {dimension_numbers = #tpu.dot_dimension_numbers<[1], [0], [0], [1], [0, 0, 1, 1], [], []>} : vector<32x32xf32>, vector<32x256xf32>, vector<32x256xf32> -> vector<32x256xf32>
    %20 = vector.broadcast %18 : vector<32x1xf32> to vector<32x256xf32>
    %21 = arith.addf %19, %20 : vector<32x256xf32>
    %22 = math.tanh %21 : vector<32x256xf32>
    %c0_9 = arith.constant 0 : index
    %c0_10 = arith.constant 0 : index
    %23 = vector.load %arg6[%c0_9, %c0_10] : memref<32x32xf32, #tpu.memory_space<vmem>>, vector<32x32xf32>
    %c0_11 = arith.constant 0 : index
    %c0_12 = arith.constant 0 : index
    %24 = vector.load %arg7[%c0_11, %c0_12] : memref<32x1xf32, #tpu.memory_space<vmem>>, vector<32x1xf32>
    %cst_13 = arith.constant dense<0.000000e+00> : vector<32x256xf32>
    %25 = tpu.matmul %23, %22, %cst_13 {dimension_numbers = #tpu.dot_dimension_numbers<[1], [0], [0], [1], [0, 0, 1, 1], [], []>} : vector<32x32xf32>, vector<32x256xf32>, vector<32x256xf32> -> vector<32x256xf32>
    %26 = vector.broadcast %24 : vector<32x1xf32> to vector<32x256xf32>
    %27 = arith.addf %25, %26 : vector<32x256xf32>
    %28 = math.tanh %27 : vector<32x256xf32>
    %c0_14 = arith.constant 0 : index
    %c0_15 = arith.constant 0 : index
    %29 = vector.load %arg8[%c0_14, %c0_15] : memref<32x32xf32, #tpu.memory_space<vmem>>, vector<32x32xf32>
    %c0_16 = arith.constant 0 : index
    %c0_17 = arith.constant 0 : index
    %30 = vector.load %arg9[%c0_16, %c0_17] : memref<32x1xf32, #tpu.memory_space<vmem>>, vector<32x1xf32>
    %cst_18 = arith.constant dense<0.000000e+00> : vector<32x256xf32>
    %31 = tpu.matmul %29, %28, %cst_18 {dimension_numbers = #tpu.dot_dimension_numbers<[1], [0], [0], [1], [0, 0, 1, 1], [], []>} : vector<32x32xf32>, vector<32x256xf32>, vector<32x256xf32> -> vector<32x256xf32>
    %32 = vector.broadcast %30 : vector<32x1xf32> to vector<32x256xf32>
    %33 = arith.addf %31, %32 : vector<32x256xf32>
    %34 = math.tanh %33 : vector<32x256xf32>
    %c0_19 = arith.constant 0 : index
    %c0_20 = arith.constant 0 : index
    %35 = vector.load %arg10[%c0_19, %c0_20] : memref<1x32xf32, #tpu.memory_space<vmem>>, vector<1x32xf32>
    %c0_21 = arith.constant 0 : index
    %c0_22 = arith.constant 0 : index
    %36 = vector.load %arg11[%c0_21, %c0_22] : memref<1x1xf32, #tpu.memory_space<vmem>>, vector<1x1xf32>
    %cst_23 = arith.constant dense<0.000000e+00> : vector<1x256xf32>
    %37 = tpu.matmul %35, %34, %cst_23 {dimension_numbers = #tpu.dot_dimension_numbers<[1], [0], [0], [1], [0, 0, 1, 1], [], []>} : vector<1x32xf32>, vector<32x256xf32>, vector<1x256xf32> -> vector<1x256xf32>
    %38 = vector.broadcast %36 : vector<1x1xf32> to vector<1x256xf32>
    %39 = arith.addf %37, %38 : vector<1x256xf32>
    %c0_24 = arith.constant 0 : index
    %c0_25 = arith.constant 0 : index
    %40 = vector.load %arg12[%c0_24, %c0_25] : memref<1x256xf32, #tpu.memory_space<vmem>>, vector<1x256xf32>
    tpu.vector_store %arg12[%c0_24, %c0_25], %39 {strides = array<i32>} : memref<1x256xf32, #tpu.memory_space<vmem>>, vector<1x256xf32>,
    return
  }
  func.func @transform_0(%arg0: i32) -> (i32, i32) {
    %c0_i32 = arith.constant 0 : i32
    %c0_i32_0 = arith.constant 0 : i32
    return %c0_i32, %arg0 : i32, i32
  }
  func.func @transform_1(%arg0: i32) -> (i32, i32) {
    %c0_i32 = arith.constant 0 : i32
    %c0_i32_0 = arith.constant 0 : i32
    %c0_i32_1 = arith.constant 0 : i32
    return %c0_i32, %c0_i32_0 : i32, i32
  }
  func.func @transform_2(%arg0: i32) -> (i32, i32) {
    %c0_i32 = arith.constant 0 : i32
    %c0_i32_0 = arith.constant 0 : i32
    %c0_i32_1 = arith.constant 0 : i32
    return %c0_i32, %c0_i32_0 : i32, i32
  }
  func.func @transform_3(%arg0: i32) -> (i32, i32) {
    %c0_i32 = arith.constant 0 : i32
    %c0_i32_0 = arith.constant 0 : i32
    %c0_i32_1 = arith.constant 0 : i32
    return %c0_i32, %c0_i32_0 : i32, i32
  }
  func.func @transform_4(%arg0: i32) -> (i32, i32) {
    %c0_i32 = arith.constant 0 : i32
    %c0_i32_0 = arith.constant 0 : i32
    %c0_i32_1 = arith.constant 0 : i32
    return %c0_i32, %c0_i32_0 : i32, i32
  }
  func.func @transform_5(%arg0: i32) -> (i32, i32) {
    %c0_i32 = arith.constant 0 : i32
    %c0_i32_0 = arith.constant 0 : i32
    %c0_i32_1 = arith.constant 0 : i32
    return %c0_i32, %c0_i32_0 : i32, i32
  }
  func.func @transform_6(%arg0: i32) -> (i32, i32) {
    %c0_i32 = arith.constant 0 : i32
    %c0_i32_0 = arith.constant 0 : i32
    %c0_i32_1 = arith.constant 0 : i32
    return %c0_i32, %c0_i32_0 : i32, i32
  }
  func.func @transform_7(%arg0: i32) -> (i32, i32) {
    %c0_i32 = arith.constant 0 : i32
    %c0_i32_0 = arith.constant 0 : i32
    %c0_i32_1 = arith.constant 0 : i32
    return %c0_i32, %c0_i32_0 : i32, i32
  }
  func.func @transform_8(%arg0: i32) -> (i32, i32) {
    %c0_i32 = arith.constant 0 : i32
    %c0_i32_0 = arith.constant 0 : i32
    %c0_i32_1 = arith.constant 0 : i32
    return %c0_i32, %c0_i32_0 : i32, i32
  }
  func.func @transform_9(%arg0: i32) -> (i32, i32) {
    %c0_i32 = arith.constant 0 : i32
    %c0_i32_0 = arith.constant 0 : i32
    %c0_i32_1 = arith.constant 0 : i32
    return %c0_i32, %c0_i32_0 : i32, i32
  }
  func.func @transform_10(%arg0: i32) -> (i32, i32) {
    %c0_i32 = arith.constant 0 : i32
    %c0_i32_0 = arith.constant 0 : i32
    %c0_i32_1 = arith.constant 0 : i32
    return %c0_i32, %c0_i32_0 : i32, i32
  }
  func.func @transform_11(%arg0: i32) -> (i32, i32) {
    %c0_i32 = arith.constant 0 : i32
    %c0_i32_0 = arith.constant 0 : i32
    return %c0_i32, %arg0 : i32, i32
  }
}

</mosaic_0001>

<llo_original>
// kernel: tpu_custom_call.1
$region0: #{tpu_custom_call.1}
  #allocation0 [shape = 'u32[]', space=smem, size = 0x4, offset = 0x4, fixed_abs, tag = 'smem constant byte address 0x4 - core index']
  #allocation1 [shape = 'u32[144,128]{1,0:T(1,128)}', space=vmem, size = 0x12000, scoped, tag = 'internal scratch']
  #allocation2 [shape = 'f32[1,1]{1,0:T(1,128)S(1)}', space=vmem, size = 0x200, scoped, tag = 'scoped memory for tpu_custom_call.1']
  %s0 = inlined_call_operand.vmem [shape: f32[2,512], index: 0, kind: input, shape index: {}]
  %s1 = inlined_call_operand.vmem [shape: f32[32,2], index: 1, kind: input, shape index: {}]
  %s2 = inlined_call_operand.vmem [shape: f32[32,1], index: 2, kind: input, shape index: {}]
  %s3 = inlined_call_operand.vmem [shape: f32[32,32], index: 3, kind: input, shape index: {}]
  %s4 = inlined_call_operand.vmem [shape: f32[32,1], index: 4, kind: input, shape index: {}]
  %s5 = inlined_call_operand.vmem [shape: f32[32,32], index: 5, kind: input, shape index: {}]
  %s6 = inlined_call_operand.vmem [shape: f32[32,1], index: 6, kind: input, shape index: {}]
  %s7 = inlined_call_operand.vmem [shape: f32[32,32], index: 7, kind: input, shape index: {}]
  %s8 = inlined_call_operand.vmem [shape: f32[32,1], index: 8, kind: input, shape index: {}]
  %s9 = inlined_call_operand.vmem [shape: f32[1,32], index: 9, kind: input, shape index: {}]
  %s10 = inlined_call_operand.<no memory space> [shape: f32[1,1], index: 10, kind: input, shape index: {}]
  %s11 = inlined_call_operand.hbm [shape: f32[1,512], index: 11, kind: output, shape index: {}]
  %s12 = sld [smem:[#allocation0]]
  $region77: #{tpu_custom_call.1} parent=0
    _
  %s14 = ssub.s32 1, %s12
  %s15 = scalar_select 0, %s14, %s12
  %v16 = vstv %s10
  %17 = vst [vmem:[#allocation2] sm:$0x1] %v16
  $region1: #{tpu_custom_call.1} parent=0
    #allocation3 [shape = 'u8[2048]{0}', space=vmem, size = 0x800, scoped, tag = 'output window, operand 0']
    #allocation4 [shape = 's32[2]{0}', space=sflag, size = 0x8, scoped, tag = 'scoped memory for tpu_custom_call.1']
    %18 = vsyncpa [#allocation4], 0
    %s19 = scalar_lea.sflag [#allocation4], 1
    %20 = vsyncpa %s19, 0
    loop: start=0, step=1, limit=4
    $region2: #{tpu_custom_call.1} parent=1 // loop_pre_header
      _
    $region3: #{tpu_custom_call.1} parent=1 // loop_header
      %s22 = sphi 0, %s26
      %p23 = scmp.ge.s32.totalorder %s22, 4
      %s32 = sphi 0, %s34
      %s35 = sphi 0, %s32
      %s36 = sphi 0, %s35
      %s52 = sphi 0, %s36
      %s56 = sphi 0, %s56
      %s58 = sphi 0, %s56
      %s59 = sphi 0, %s58
      %s73 = sphi 0, %s59
      %s77 = sphi 0, %s77
      %s79 = sphi 0, %s77
      %s80 = sphi 0, %s79
      %s94 = sphi 0, %s80
      %s98 = sphi 0, %s98
      %s100 = sphi 0, %s98
      %s101 = sphi 0, %s100
      %s115 = sphi 0, %s101
      %s119 = sphi 0, %s119
      %s121 = sphi 0, %s119
      %s122 = sphi 0, %s121
      %s136 = sphi 0, %s122
      %s140 = sphi 0, %s140
      %s142 = sphi 0, %s140
      %s143 = sphi 0, %s142
      %s157 = sphi 0, %s143
      %s161 = sphi 0, %s161
      %s163 = sphi 0, %s161
      %s164 = sphi 0, %s163
      %s178 = sphi 0, %s164
      %s182 = sphi 0, %s182
      %s184 = sphi 0, %s182
      %s185 = sphi 0, %s184
      %s199 = sphi 0, %s185
      %s203 = sphi 0, %s203
      %s205 = sphi 0, %s203
      %s206 = sphi 0, %s205
      %s220 = sphi 0, %s206
      %s224 = sphi 0, %s224
      %s226 = sphi 0, %s224
      %s227 = sphi 0, %s226
      %s241 = sphi 0, %s227
      %s245 = sphi 0, %s245
      %s247 = sphi 0, %s245
      %s248 = sphi 0, %s247
      %s262 = sphi 0, %s248
      %s268 = sphi 0, %s270
      %s271 = sphi 0, %s268
      %s272 = sphi 0, %s271
      %s288 = sphi 0, %s272
    $region4: #{tpu_custom_call.1} parent=1 // loop_header_branch
      %25 = sbr.rel (%p23) target = $region8
    $region5: #{tpu_custom_call.1} parent=1 // loop_body
      %s27 = ssub.s32 %s22, 1
      %s28 = ssub.s32 %s22, 2
      %s29 = sadd.s32 %s22, 1
      %s30 = ssub.s32 %s22, %s29
      %p31 = scmp.eq.s32.totalorder %s30, 0
      %s33 = sadd.s32 %s32, 1
      %s34 = scalar_select %p31, %s32, %s33
      %p37 = pneg %p31
      %p38 = scmp.eq.s32.totalorder %s22, 1
      %p39 = por %p37, %p38
      %p40 = scmp.ne.s32.totalorder %s32, %s35
      %p41 = scmp.eq.s32.totalorder %s22, 0
      %p42 = por %p40, %p41
      %p43 = scmp.ne.s32.totalorder %s32, %s35
      %p44 = scmp.eq.s32.totalorder %s27, 1
      %p45 = por %p43, %p44
      %p46 = scmp.ne.s32.totalorder %s35, %s36
      %p47 = scmp.eq.s32.totalorder %s27, 0
      %p48 = por %p46, %p47
      %p49 = scmp.ne.s32.totalorder %s35, %s36
      %p50 = scmp.eq.s32.totalorder %s28, 1
      %p51 = por %p49, %p50
      %p53 = scmp.ne.s32.totalorder %s36, %s52
      %p54 = scmp.eq.s32.totalorder %s28, 0
      %p55 = por %p53, %p54
      %s57 = sadd.s32 %s56, 1
      %p60 = scmp.eq.s32.totalorder %s22, 1
      %p61 = scmp.ne.s32.totalorder %s56, %s58
      %p62 = scmp.eq.s32.totalorder %s22, 0
      %p63 = por %p61, %p62
      %p64 = scmp.ne.s32.totalorder %s56, %s58
      %p65 = scmp.eq.s32.totalorder %s27, 1
      %p66 = por %p64, %p65
      %p67 = scmp.ne.s32.totalorder %s58, %s59
      %p68 = scmp.eq.s32.totalorder %s27, 0
      %p69 = por %p67, %p68
      %p70 = scmp.ne.s32.totalorder %s58, %s59
      %p71 = scmp.eq.s32.totalorder %s28, 1
      %p72 = por %p70, %p71
      %p74 = scmp.ne.s32.totalorder %s59, %s73
      %p75 = scmp.eq.s32.totalorder %s28, 0
      %p76 = por %p74, %p75
      %s78 = sadd.s32 %s77, 1
      %p81 = scmp.eq.s32.totalorder %s22, 1
      %p82 = scmp.ne.s32.totalorder %s77, %s79
      %p83 = scmp.eq.s32.totalorder %s22, 0
      %p84 = por %p82, %p83
      %p85 = scmp.ne.s32.totalorder %s77, %s79
      %p86 = scmp.eq.s32.totalorder %s27, 1
      %p87 = por %p85, %p86
      %p88 = scmp.ne.s32.totalorder %s79, %s80
      %p89 = scmp.eq.s32.totalorder %s27, 0
      %p90 = por %p88, %p89
      %p91 = scmp.ne.s32.totalorder %s79, %s80
      %p92 = scmp.eq.s32.totalorder %s28, 1
      %p93 = por %p91, %p92
      %p95 = scmp.ne.s32.totalorder %s80, %s94
      %p96 = scmp.eq.s32.totalorder %s28, 0
      %p97 = por %p95, %p96
      %s99 = sadd.s32 %s98, 1
      %p102 = scmp.eq.s32.totalorder %s22, 1
      %p103 = scmp.ne.s32.totalorder %s98, %s100
      %p104 = scmp.eq.s32.totalorder %s22, 0
      %p105 = por %p103, %p104
      %p106 = scmp.ne.s32.totalorder %s98, %s100
      %p107 = scmp.eq.s32.totalorder %s27, 1
      %p108 = por %p106, %p107
      %p109 = scmp.ne.s32.totalorder %s100, %s101
      %p110 = scmp.eq.s32.totalorder %s27, 0
      %p111 = por %p109, %p110
      %p112 = scmp.ne.s32.totalorder %s100, %s101
      %p113 = scmp.eq.s32.totalorder %s28, 1
      %p114 = por %p112, %p113
      %p116 = scmp.ne.s32.totalorder %s101, %s115
      %p117 = scmp.eq.s32.totalorder %s28, 0
      %p118 = por %p116, %p117
      %s120 = sadd.s32 %s119, 1
      %p123 = scmp.eq.s32.totalorder %s22, 1
      %p124 = scmp.ne.s32.totalorder %s119, %s121
      %p125 = scmp.eq.s32.totalorder %s22, 0
      %p126 = por %p124, %p125
      %p127 = scmp.ne.s32.totalorder %s119, %s121
      %p128 = scmp.eq.s32.totalorder %s27, 1
      %p129 = por %p127, %p128
      %p130 = scmp.ne.s32.totalorder %s121, %s122
      %p131 = scmp.eq.s32.totalorder %s27, 0
      %p132 = por %p130, %p131
      %p133 = scmp.ne.s32.totalorder %s121, %s122
      %p134 = scmp.eq.s32.totalorder %s28, 1
      %p135 = por %p133, %p134
      %p137 = scmp.ne.s32.totalorder %s122, %s136
      %p138 = scmp.eq.s32.totalorder %s28, 0
      %p139 = por %p137, %p138
      %s141 = sadd.s32 %s140, 1
      %p144 = scmp.eq.s32.totalorder %s22, 1
      %p145 = scmp.ne.s32.totalorder %s140, %s142
      %p146 = scmp.eq.s32.totalorder %s22, 0
      %p147 = por %p145, %p146
      %p148 = scmp.ne.s32.totalorder %s140, %s142
      %p149 = scmp.eq.s32.totalorder %s27, 1
      %p150 = por %p148, %p149
      %p151 = scmp.ne.s32.totalorder %s142, %s143
      %p152 = scmp.eq.s32.totalorder %s27, 0
      %p153 = por %p151, %p152
      %p154 = scmp.ne.s32.totalorder %s142, %s143
      %p155 = scmp.eq.s32.totalorder %s28, 1
      %p156 = por %p154, %p155
      %p158 = scmp.ne.s32.totalorder %s143, %s157
      %p159 = scmp.eq.s32.totalorder %s28, 0
      %p160 = por %p158, %p159
      %s162 = sadd.s32 %s161, 1
      %p165 = scmp.eq.s32.totalorder %s22, 1
      %p166 = scmp.ne.s32.totalorder %s161, %s163
      %p167 = scmp.eq.s32.totalorder %s22, 0
      %p168 = por %p166, %p167
      %p169 = scmp.ne.s32.totalorder %s161, %s163
      %p170 = scmp.eq.s32.totalorder %s27, 1
      %p171 = por %p169, %p170
      %p172 = scmp.ne.s32.totalorder %s163, %s164
      %p173 = scmp.eq.s32.totalorder %s27, 0
      %p174 = por %p172, %p173
      %p175 = scmp.ne.s32.totalorder %s163, %s164
      %p176 = scmp.eq.s32.totalorder %s28, 1
      %p177 = por %p175, %p176
      %p179 = scmp.ne.s32.totalorder %s164, %s178
      %p180 = scmp.eq.s32.totalorder %s28, 0
      %p181 = por %p179, %p180
      %s183 = sadd.s32 %s182, 1
      %p186 = scmp.eq.s32.totalorder %s22, 1
      %p187 = scmp.ne.s32.totalorder %s182, %s184
      %p188 = scmp.eq.s32.totalorder %s22, 0
      %p189 = por %p187, %p188
      %p190 = scmp.ne.s32.totalorder %s182, %s184
      %p191 = scmp.eq.s32.totalorder %s27, 1
      %p192 = por %p190, %p191
      %p193 = scmp.ne.s32.totalorder %s184, %s185
      %p194 = scmp.eq.s32.totalorder %s27, 0
      %p195 = por %p193, %p194
      %p196 = scmp.ne.s32.totalorder %s184, %s185
      %p197 = scmp.eq.s32.totalorder %s28, 1
      %p198 = por %p196, %p197
      %p200 = scmp.ne.s32.totalorder %s185, %s199
      %p201 = scmp.eq.s32.totalorder %s28, 0
      %p202 = por %p200, %p201
      %s204 = sadd.s32 %s203, 1
      %p207 = scmp.eq.s32.totalorder %s22, 1
      %p208 = scmp.ne.s32.totalorder %s203, %s205
      %p209 = scmp.eq.s32.totalorder %s22, 0
      %p210 = por %p208, %p209
      %p211 = scmp.ne.s32.totalorder %s203, %s205
      %p212 = scmp.eq.s32.totalorder %s27, 1
      %p213 = por %p211, %p212
      %p214 = scmp.ne.s32.totalorder %s205, %s206
      %p215 = scmp.eq.s32.totalorder %s27, 0
      %p216 = por %p214, %p215
      %p217 = scmp.ne.s32.totalorder %s205, %s206
      %p218 = scmp.eq.s32.totalorder %s28, 1
      %p219 = por %p217, %p218
      %p221 = scmp.ne.s32.totalorder %s206, %s220
      %p222 = scmp.eq.s32.totalorder %s28, 0
      %p223 = por %p221, %p222
      %s225 = sadd.s32 %s224, 1
      %p228 = scmp.eq.s32.totalorder %s22, 1
      %p229 = scmp.ne.s32.totalorder %s224, %s226
      %p230 = scmp.eq.s32.totalorder %s22, 0
      %p231 = por %p229, %p230
      %p232 = scmp.ne.s32.totalorder %s224, %s226
      %p233 = scmp.eq.s32.totalorder %s27, 1
      %p234 = por %p232, %p233
      %p235 = scmp.ne.s32.totalorder %s226, %s227
      %p236 = scmp.eq.s32.totalorder %s27, 0
      %p237 = por %p235, %p236
      %p238 = scmp.ne.s32.totalorder %s226, %s227
      %p239 = scmp.eq.s32.totalorder %s28, 1
      %p240 = por %p238, %p239
      %p242 = scmp.ne.s32.totalorder %s227, %s241
      %p243 = scmp.eq.s32.totalorder %s28, 0
      %p244 = por %p242, %p243
      %s246 = sadd.s32 %s245, 1
      %p249 = scmp.eq.s32.totalorder %s22, 1
      %p250 = scmp.ne.s32.totalorder %s245, %s247
      %p251 = scmp.eq.s32.totalorder %s22, 0
      %p252 = por %p250, %p251
      %p253 = scmp.ne.s32.totalorder %s245, %s247
      %p254 = scmp.eq.s32.totalorder %s27, 1
      %p255 = por %p253, %p254
      %p256 = scmp.ne.s32.totalorder %s247, %s248
      %p257 = scmp.eq.s32.totalorder %s27, 0
      %p258 = por %p256, %p257
      %p259 = scmp.ne.s32.totalorder %s247, %s248
      %p260 = scmp.eq.s32.totalorder %s28, 1
      %p261 = por %p259, %p260
      %p263 = scmp.ne.s32.totalorder %s248, %s262
      %p264 = scmp.eq.s32.totalorder %s28, 0
      %p265 = por %p263, %p264
      %s266 = ssub.s32 %s22, %s29
      %p267 = scmp.eq.s32.totalorder %s266, 0
      %s269 = sadd.s32 %s268, 1
      %s270 = scalar_select %p267, %s268, %s269
      %p273 = pneg %p267
      %p274 = scmp.eq.s32.totalorder %s22, 1
      %p275 = por %p273, %p274
      %p276 = scmp.ne.s32.totalorder %s268, %s271
      %p277 = scmp.eq.s32.totalorder %s22, 0
      %p278 = por %p276, %p277
      %p279 = scmp.ne.s32.totalorder %s268, %s271
      %p280 = scmp.eq.s32.totalorder %s27, 1
      %p281 = por %p279, %p280
      %p282 = scmp.ne.s32.totalorder %s271, %s272
      %p283 = scmp.eq.s32.totalorder %s27, 0
      %p284 = por %p282, %p283
      %p285 = scmp.ne.s32.totalorder %s271, %s272
      %p286 = scmp.eq.s32.totalorder %s28, 1
      %p287 = por %p285, %p286
      %p289 = scmp.ne.s32.totalorder %s272, %s288
      %p290 = scmp.eq.s32.totalorder %s28, 0
      %p291 = por %p289, %p290
      %p292 = scmp.le.s32.totalorder 1, %s22
      %p293 = scmp.lt.s32.totalorder %s22, 3
      %p294 = pnand %p292, %p293
      %p295 = pneg %p294
      // Predicated region
      $region9: #{tpu_custom_call.1} parent=5 // pred_check
        _
      $region10: #{tpu_custom_call.1} parent=5 // pred_check_branch
        %297 = sbr.rel (%p294) target = $region12
      $region11: #{tpu_custom_call.1} parent=5 // pred_region
        %s298 = ssub.s32 %s22, 1
        // Predicated region
        $region13: #{tpu_custom_call.1} parent=11 // pred_check
          %p299 = pneg %p69
        $region14: #{tpu_custom_call.1} parent=11 // pred_check_branch
          %301 = sbr.rel (%p299) target = $region16
        $region15: #{tpu_custom_call.1} parent=11 // pred_region
          _
        $region16: #{tpu_custom_call.1} parent=11 // pred_fallthru
          _
        // Predicated region
        $region17: #{tpu_custom_call.1} parent=11 // pred_check
          %p302 = pneg %p90
        $region18: #{tpu_custom_call.1} parent=11 // pred_check_branch
          %304 = sbr.rel (%p302) target = $region20
        $region19: #{tpu_custom_call.1} parent=11 // pred_region
          _
        $region20: #{tpu_custom_call.1} parent=11 // pred_fallthru
          _
        // Predicated region
        $region21: #{tpu_custom_call.1} parent=11 // pred_check
          %p305 = pneg %p111
        $region22: #{tpu_custom_call.1} parent=11 // pred_check_branch
          %307 = sbr.rel (%p305) target = $region24
        $region23: #{tpu_custom_call.1} parent=11 // pred_region
          _
        $region24: #{tpu_custom_call.1} parent=11 // pred_fallthru
          _
        // Predicated region
        $region25: #{tpu_custom_call.1} parent=11 // pred_check
          %p308 = pneg %p132
        $region26: #{tpu_custom_call.1} parent=11 // pred_check_branch
          %310 = sbr.rel (%p308) target = $region28
        $region27: #{tpu_custom_call.1} parent=11 // pred_region
          _
        $region28: #{tpu_custom_call.1} parent=11 // pred_fallthru
          _
        // Predicated region
        $region29: #{tpu_custom_call.1} parent=11 // pred_check
          %p311 = pneg %p153
        $region30: #{tpu_custom_call.1} parent=11 // pred_check_branch
          %313 = sbr.rel (%p311) target = $region32
        $region31: #{tpu_custom_call.1} parent=11 // pred_region
          _
        $region32: #{tpu_custom_call.1} parent=11 // pred_fallthru
          _
        // Predicated region
        $region33: #{tpu_custom_call.1} parent=11 // pred_check
          %p314 = pneg %p174
        $region34: #{tpu_custom_call.1} parent=11 // pred_check_branch
          %316 = sbr.rel (%p314) target = $region36
        $region35: #{tpu_custom_call.1} parent=11 // pred_region
          _
        $region36: #{tpu_custom_call.1} parent=11 // pred_fallthru
          _
        // Predicated region
        $region37: #{tpu_custom_call.1} parent=11 // pred_check
          %p317 = pneg %p195
        $region38: #{tpu_custom_call.1} parent=11 // pred_check_branch
          %319 = sbr.rel (%p317) target = $region40
        $region39: #{tpu_custom_call.1} parent=11 // pred_region
          _
        $region40: #{tpu_custom_call.1} parent=11 // pred_fallthru
          _
        // Predicated region
        $region41: #{tpu_custom_call.1} parent=11 // pred_check
          %p320 = pneg %p216
        $region42: #{tpu_custom_call.1} parent=11 // pred_check_branch
          %322 = sbr.rel (%p320) target = $region44
        $region43: #{tpu_custom_call.1} parent=11 // pred_region
          _
        $region44: #{tpu_custom_call.1} parent=11 // pred_fallthru
          _
        // Predicated region
        $region45: #{tpu_custom_call.1} parent=11 // pred_check
          %p323 = pneg %p237
        $region46: #{tpu_custom_call.1} parent=11 // pred_check_branch
          %325 = sbr.rel (%p323) target = $region48
        $region47: #{tpu_custom_call.1} parent=11 // pred_region
          _
        $region48: #{tpu_custom_call.1} parent=11 // pred_fallthru
          _
        // Predicated region
        $region49: #{tpu_custom_call.1} parent=11 // pred_check
          %p326 = pneg %p258
        $region50: #{tpu_custom_call.1} parent=11 // pred_check_branch
          %328 = sbr.rel (%p326) target = $region52
        $region51: #{tpu_custom_call.1} parent=11 // pred_region
          _
        $region52: #{tpu_custom_call.1} parent=11 // pred_fallthru
          _
      $region12: #{tpu_custom_call.1} parent=5 // pred_fallthru
        _
      %p329 = scmp.lt.s32.totalorder %s22, 2
      // Predicated region
      $region53: #{tpu_custom_call.1} parent=5 // pred_check
        %p330 = pneg %p329
      $region54: #{tpu_custom_call.1} parent=5 // pred_check_branch
        %332 = sbr.rel (%p330) target = $region56
      $region55: #{tpu_custom_call.1} parent=5 // pred_region
        // Predicated region
        $region57: #{tpu_custom_call.1} parent=55 // pred_check
          %p333 = pneg %p42
        $region58: #{tpu_custom_call.1} parent=55 // pred_check_branch
          %335 = sbr.rel (%p333) target = $region60
        $region59: #{tpu_custom_call.1} parent=55 // pred_region
          %s336 = smul.u32 2, %s22
          %p337 = scmp.lt.s32.totalorder %s336, 3
          %s338 = scalar_select %p337, %s336, 3
          %s339 = smul.addr %s338, 2
          %s340 = scalar_lea.vmem %s0, %s339
          %s341 = smul.u32 2, %s22
        $region60: #{tpu_custom_call.1} parent=55 // pred_fallthru
          _
      $region56: #{tpu_custom_call.1} parent=5 // pred_fallthru
        _
      %p342 = scmp.le.s32.totalorder 1, %s22
      %p343 = scmp.lt.s32.totalorder %s22, 3
      %p344 = pnand %p342, %p343
      %p345 = pneg %p344
      // Predicated region
      $region61: #{tpu_custom_call.1} parent=5 // pred_check
        _
      $region62: #{tpu_custom_call.1} parent=5 // pred_check_branch
        %347 = sbr.rel (%p344) target = $region64
      $region63: #{tpu_custom_call.1} parent=5 // pred_region
        %s348 = ssub.s32 %s22, 1
        %s349 = smul.u32 2, %s27
        %p350 = scmp.lt.s32.totalorder %s349, 3
        %s351 = scalar_select %p350, %s349, 3
        %s352 = smul.addr %s351, 2
        %s353 = scalar_lea.vmem %s0, %s352
        %p354 = pneg %p48
        %p355 = pneg %p45
        %p356 = pneg %p69
        %p357 = pneg %p66
        %p358 = pneg %p90
        %p359 = pneg %p87
        %p360 = pneg %p111
        %p361 = pneg %p108
        %p362 = pneg %p132
        %p363 = pneg %p129
        %p364 = pneg %p153
        %p365 = pneg %p150
        %p366 = pneg %p174
        %p367 = pneg %p171
        %p368 = pneg %p195
        %p369 = pneg %p192
        %p370 = pneg %p216
        %p371 = pneg %p213
        %p372 = pneg %p237
        %p373 = pneg %p234
        %p374 = pneg %p258
        %p375 = pneg %p255
        %p376 = pneg %p284
        %p377 = pneg %p281
        %s378 = sand.u32 %s271, 1
        %s379 = scalar_lea.sflag [#allocation4], %s378
        %s380 = sand.u32 %s271, 1
        %s381 = smul.addr %s380, 2
        %s382 = scalar_lea.vmem [#allocation3], %s381
        %s383 = smul.u32 2, %s27
        %p384 = scmp.lt.s32.totalorder %s383, 3
        %s385 = scalar_select %p384, %s383, 3
        %s386 = smul.addr %s385, 2
        %s387 = scalar_lea.vmem %s0, %s386
        %s388 = smul.u32 2, %s27
        %s389 = smul.u32 2, %s27
        %v390 = vld [vmem:[%s387] sm:$0xf]
        %v391 = vld [vmem:[%s1] sm:$0xff]
        %v392 = vld [vmem:[%s1 + $0x8] sm:$0xff]
        %v393 = vld [vmem:[%s1 + $0x10] sm:$0xff]
        %v394 = vld [vmem:[%s1 + $0x18] sm:$0xff]
        %v395 = vld [vmem:[%s2] sm:$0xff]
        %v396 = vld [vmem:[%s2 + $0x8] sm:$0xff]
        %v397 = vld [vmem:[%s2 + $0x10] sm:$0xff]
        %v398 = vld [vmem:[%s2 + $0x18] sm:$0xff]
        %400 = vset.pattern.permute.xlu0 0
        %401 = vperm.xlu0 %400, %v391
        %v402 = vpop.permute.xlu0 %401
        %405 = vset.pattern.permute.xlu0 0
        %406 = vperm.xlu0 %405, %v392
        %v407 = vpop.permute.xlu0 %406
        %410 = vset.pattern.permute.xlu0 0
        %411 = vperm.xlu0 %410, %v393
        %v412 = vpop.permute.xlu0 %411
        %415 = vset.pattern.permute.xlu0 0
        %416 = vperm.xlu0 %415, %v394
        %v417 = vpop.permute.xlu0 %416
        %v420 = vlaneseq
        %v421 = vshrl.u32 %v420, 7
        %v422 = vsub.s32 0, %v421
        %v423 = vrot.slane %v390, %v422
        %v424 = vlaneseq
        %v425 = vshrl.u32 %v424, 7
        %v426 = vsub.s32 2, %v425
        %v427 = vrot.slane %v390, %v426
        %v430 = vlaneseq
        %v431 = vshrl.u32 %v430, 7
        %v432 = vsub.s32 0, %v431
        %v433 = vrot.slane %v423, %v432
        %v434 = vlaneseq
        %v435 = vshrl.u32 %v434, 7
        %v436 = vsub.s32 0, %v435
        %v437 = vrot.slane %v427, %v436
        %v438 = vmul.f32 %v402, %v433
        %v439 = vmul.f32 %v402, %v437
        %v440 = vmul.f32 %v407, %v433
        %v441 = vmul.f32 %v407, %v437
        %v442 = vmul.f32 %v412, %v433
        %v443 = vmul.f32 %v412, %v437
        %v444 = vmul.f32 %v417, %v433
        %v445 = vmul.f32 %v417, %v437
        %446 = vset.pattern.permute.xlu0 1
        %447 = vperm.xlu0 %446, %v391
        %v448 = vpop.permute.xlu0 %447
        %450 = vset.pattern.permute.xlu0 1
        %451 = vperm.xlu0 %450, %v392
        %v452 = vpop.permute.xlu0 %451
        %454 = vset.pattern.permute.xlu0 1
        %455 = vperm.xlu0 %454, %v393
        %v456 = vpop.permute.xlu0 %455
        %458 = vset.pattern.permute.xlu0 1
        %459 = vperm.xlu0 %458, %v394
        %v460 = vpop.permute.xlu0 %459
        %v462 = vlaneseq
        %v463 = vshrl.u32 %v462, 7
        %v464 = vsub.s32 1, %v463
        %v465 = vrot.slane %v390, %v464
        %v466 = vlaneseq
        %v467 = vshrl.u32 %v466, 7
        %v468 = vsub.s32 3, %v467
        %v469 = vrot.slane %v390, %v468
        %v472 = vlaneseq
        %v473 = vshrl.u32 %v472, 7
        %v474 = vsub.s32 1, %v473
        %v475 = vrot.slane %v465, %v474
        %v476 = vlaneseq
        %v477 = vshrl.u32 %v476, 7
        %v478 = vsub.s32 1, %v477
        %v479 = vrot.slane %v469, %v478
        %v480 = vmul.f32 %v448, %v475
        %v481 = vmul.f32 %v448, %v479
        %v482 = vmul.f32 %v452, %v475
        %v483 = vmul.f32 %v452, %v479
        %v484 = vmul.f32 %v456, %v475
        %v485 = vmul.f32 %v456, %v479
        %v486 = vmul.f32 %v460, %v475
        %v487 = vmul.f32 %v460, %v479
        %v488 = vadd.f32 %v438, %v480
        %v489 = vadd.f32 %v439, %v481
        %v490 = vadd.f32 %v440, %v482
        %v491 = vadd.f32 %v441, %v483
        %v492 = vadd.f32 %v442, %v484
        %v493 = vadd.f32 %v443, %v485
        %v494 = vadd.f32 %v444, %v486
        %v495 = vadd.f32 %v445, %v487
        %497 = vset.pattern.permute.xlu0 0
        %498 = vperm.xlu0 %497, %v395
        %v499 = vpop.permute.xlu0 %498
        %502 = vset.pattern.permute.xlu0 0
        %503 = vperm.xlu0 %502, %v396
        %v504 = vpop.permute.xlu0 %503
        %507 = vset.pattern.permute.xlu0 0
        %508 = vperm.xlu0 %507, %v397
        %v509 = vpop.permute.xlu0 %508
        %512 = vset.pattern.permute.xlu0 0
        %513 = vperm.xlu0 %512, %v398
        %v514 = vpop.permute.xlu0 %513
        %v516 = vadd.f32 %v488, %v499
        %v517 = vadd.f32 %v489, %v499
        %v518 = vadd.f32 %v490, %v504
        %v519 = vadd.f32 %v491, %v504
        %v520 = vadd.f32 %v492, %v509
        %v521 = vadd.f32 %v493, %v509
        %v522 = vadd.f32 %v494, %v514
        %v523 = vadd.f32 %v495, %v514
        %v524 = vtanh.pop %v516
        %v525 = vtanh.pop %v517
        %v526 = vtanh.pop %v518
        %v527 = vtanh.pop %v519
        %v528 = vtanh.pop %v520
        %v529 = vtanh.pop %v521
        %v530 = vtanh.pop %v522
        %v531 = vtanh.pop %v523
        %v532 = vld [vmem:[%s3] sm:$0xff]
        %v533 = vld [vmem:[%s3 + $0x8] sm:$0xff]
        %v534 = vld [vmem:[%s3 + $0x10] sm:$0xff]
        %v535 = vld [vmem:[%s3 + $0x18] sm:$0xff]
        %v536 = vld [vmem:[%s4] sm:$0xff]
        %v537 = vld [vmem:[%s4 + $0x8] sm:$0xff]
        %v538 = vld [vmem:[%s4 + $0x10] sm:$0xff]
        %v539 = vld [vmem:[%s4 + $0x18] sm:$0xff]
        %541 = vset.pattern.permute.xlu0 0
        %542 = vperm.xlu0 %541, %v536
        %v543 = vpop.permute.xlu0 %542
        %546 = vset.pattern.permute.xlu0 0
        %547 = vperm.xlu0 %546, %v537
        %v548 = vpop.permute.xlu0 %547
        %551 = vset.pattern.permute.xlu0 0
        %552 = vperm.xlu0 %551, %v538
        %v553 = vpop.permute.xlu0 %552
        %556 = vset.pattern.permute.xlu0 0
        %557 = vperm.xlu0 %556, %v539
        %v558 = vpop.permute.xlu0 %557
        %vm560 = vcmask 261120
        %v562 = vsel %vm560, %v532, 0
        %v565 = vsel %vm560, %v533, 0
        %v568 = vsel %vm560, %v534, 0
        %v571 = vsel %vm560, %v535, 0
        %573 = vmatprep.subr.mxu0 %v525
        %574 = vmatpush1.msra.mxu0 %v524
        %575 = vmatprep.subr.mxu0 %v527
        %576 = vmatpush1.msra.mxu0 %v526
        %577 = vmatprep.subr.mxu0 %v529
        %578 = vmatpush1.msra.mxu0 %v528
        %579 = vmatprep.subr.mxu0 %v531
        %580 = vmatpush1.msra.mxu0 %v530
        %581 = vmatprep.subr.mxu0 0.0
        %582 = vmatpush1.msra.mxu0 0.0
        %583 = vmatprep.subr.mxu0 0.0
        %584 = vmatpush1.msra.mxu0 0.0
        %585 = vmatprep.subr.mxu0 0.0
        %586 = vmatpush1.msra.mxu0 0.0
        %587 = vmatprep.subr.mxu0 0.0
        %588 = vmatpush1.msra.mxu0 0.0
        %589 = vmatprep.subr.mxu0 0.0
        %590 = vmatpush1.msra.mxu0 0.0
        %591 = vmatprep.subr.mxu0 0.0
        %592 = vmatpush1.msra.mxu0 0.0
        %593 = vmatprep.subr.mxu0 0.0
        %594 = vmatpush1.msra.mxu0 0.0
        %595 = vmatprep.subr.mxu0 0.0
        %596 = vmatpush1.msra.mxu0 0.0
        %597 = vmatprep.subr.mxu0 0.0
        %598 = vmatpush1.msra.mxu0 0.0
        %599 = vmatprep.subr.mxu0 0.0
        %600 = vmatpush1.msra.mxu0 0.0
        %601 = vmatprep.subr.mxu0 0.0
        %602 = vmatpush1.msra.mxu0 0.0
        %603 = vmatprep.subr.mxu0 0.0
        %604 = vmatpush1.msra.mxu0 0.0
        %605 = vmatprep.subr.mxu0 0.0
        %606 = vmatpush1.msra.mxu0 0.0
        %607 = vmatprep.subr.mxu0 0.0
        %608 = vmatpush1.msra.mxu0 0.0
        %609 = vmatprep.subr.mxu0 0.0
        %610 = vmatpush1.msra.mxu0 0.0
        %611 = vmatprep.subr.mxu0 0.0
        %612 = vmatpush1.msra.mxu0 0.0
        %613 = vmatprep.subr.mxu0 0.0
        %614 = vmatpush1.msra.mxu0 0.0
        %615 = vmatprep.subr.mxu0 0.0
        %616 = vmatpush1.msra.mxu0 0.0
        %617 = vmatprep.subr.mxu0 0.0
        %618 = vmatpush1.msra.mxu0 0.0
        %619 = vmatprep.subr.mxu0 0.0
        %620 = vmatpush1.msra.mxu0 0.0
        %621 = vmatprep.subr.mxu0 0.0
        %622 = vmatpush1.msra.mxu0 0.0
        %623 = vmatprep.subr.mxu0 0.0
        %624 = vmatpush1.msra.mxu0 0.0
        %625 = vmatprep.subr.mxu0 0.0
        %626 = vmatpush1.msra.mxu0 0.0
        %627 = vmatprep.subr.mxu0 0.0
        %628 = vmatpush1.msra.mxu0 0.0
        %629 = vmatprep.subr.mxu0 0.0
        %630 = vmatpush1.msra.mxu0 0.0
        %631 = vmatprep.subr.mxu0 0.0
        %632 = vmatpush1.msra.mxu0 0.0
        %633 = vmatprep.subr.mxu0 0.0
        %634 = vmatpush1.msra.mxu0 0.0
        %635 = vmatprep.subr.mxu0 0.0
        %636 = vmatpush1.msra.mxu0 0.0
        %637 = vmatprep.mubr.f32.mxu0 0.0
        %638 = vmatmul.mubr.f32.gmra.mrb[0].mxu0 %v562
        %v639 = vpop.f32.mrb[0].mxu0
        %v640 = vadd.f32 %v543, %v639
        %v641 = vpop.f32.mrb[0].mxu0
        %v642 = vadd.f32 %v543, %v641
        %643 = vmatprep.mubr.f32.mxu0 0.0
        %644 = vmatmul.mubr.f32.gmra.mrb[0].mxu0 %v565
        %v645 = vpop.f32.mrb[0].mxu0
        %v646 = vadd.f32 %v548, %v645
        %v647 = vpop.f32.mrb[0].mxu0
        %v648 = vadd.f32 %v548, %v647
        %649 = vmatprep.mubr.f32.mxu0 0.0
        %650 = vmatmul.mubr.f32.gmra.mrb[0].mxu0 %v568
        %v651 = vpop.f32.mrb[0].mxu0
        %v652 = vadd.f32 %v553, %v651
        %v653 = vpop.f32.mrb[0].mxu0
        %v654 = vadd.f32 %v553, %v653
        %655 = vmatprep.mubr.f32.mxu0 0.0
        %656 = vmatmul.mubr.f32.gmra.mrb[0].mxu0 %v571
        %v657 = vpop.f32.mrb[0].mxu0
        %v658 = vadd.f32 %v558, %v657
        %v659 = vpop.f32.mrb[0].mxu0
        %v660 = vadd.f32 %v558, %v659
        %661 = vdwg.mxu0
        %v662 = vtanh.pop %v640
        %v663 = vtanh.pop %v642
        %v664 = vtanh.pop %v646
        %v665 = vtanh.pop %v648
        %v666 = vtanh.pop %v652
        %v667 = vtanh.pop %v654
        %v668 = vtanh.pop %v658
        %v669 = vtanh.pop %v660
        %v670 = vld [vmem:[%s5] sm:$0xff]
        %v671 = vld [vmem:[%s5 + $0x8] sm:$0xff]
        %v672 = vld [vmem:[%s5 + $0x10] sm:$0xff]
        %v673 = vld [vmem:[%s5 + $0x18] sm:$0xff]
        %v674 = vld [vmem:[%s6] sm:$0xff]
        %v675 = vld [vmem:[%s6 + $0x8] sm:$0xff]
        %v676 = vld [vmem:[%s6 + $0x10] sm:$0xff]
        %v677 = vld [vmem:[%s6 + $0x18] sm:$0xff]
        %679 = vset.pattern.permute.xlu0 0
        %680 = vperm.xlu0 %679, %v674
        %v681 = vpop.permute.xlu0 %680
        %684 = vset.pattern.permute.xlu0 0
        %685 = vperm.xlu0 %684, %v675
        %v686 = vpop.permute.xlu0 %685
        %689 = vset.pattern.permute.xlu0 0
        %690 = vperm.xlu0 %689, %v676
        %v691 = vpop.permute.xlu0 %690
        %694 = vset.pattern.permute.xlu0 0
        %695 = vperm.xlu0 %694, %v677
        %v696 = vpop.permute.xlu0 %695
        %v699 = vsel %vm560, %v670, 0
        %v702 = vsel %vm560, %v671, 0
        %v705 = vsel %vm560, %v672, 0
        %v708 = vsel %vm560, %v673, 0
        %710 = vmatprep.subr.mxu0 %v663
        %711 = vmatpush1.msra.mxu0 %v662
        %712 = vmatprep.subr.mxu0 %v665
        %713 = vmatpush1.msra.mxu0 %v664
        %714 = vmatprep.subr.mxu0 %v667
        %715 = vmatpush1.msra.mxu0 %v666
        %716 = vmatprep.subr.mxu0 %v669
        %717 = vmatpush1.msra.mxu0 %v668
        %718 = vmatprep.subr.mxu0 0.0
        %719 = vmatpush1.msra.mxu0 0.0
        %720 = vmatprep.subr.mxu0 0.0
        %721 = vmatpush1.msra.mxu0 0.0
        %722 = vmatprep.subr.mxu0 0.0
        %723 = vmatpush1.msra.mxu0 0.0
        %724 = vmatprep.subr.mxu0 0.0
        %725 = vmatpush1.msra.mxu0 0.0
        %726 = vmatprep.subr.mxu0 0.0
        %727 = vmatpush1.msra.mxu0 0.0
        %728 = vmatprep.subr.mxu0 0.0
        %729 = vmatpush1.msra.mxu0 0.0
        %730 = vmatprep.subr.mxu0 0.0
        %731 = vmatpush1.msra.mxu0 0.0
        %732 = vmatprep.subr.mxu0 0.0
        %733 = vmatpush1.msra.mxu0 0.0
        %734 = vmatprep.subr.mxu0 0.0
        %735 = vmatpush1.msra.mxu0 0.0
        %736 = vmatprep.subr.mxu0 0.0
        %737 = vmatpush1.msra.mxu0 0.0
        %738 = vmatprep.subr.mxu0 0.0
        %739 = vmatpush1.msra.mxu0 0.0
        %740 = vmatprep.subr.mxu0 0.0
        %741 = vmatpush1.msra.mxu0 0.0
        %742 = vmatprep.subr.mxu0 0.0
        %743 = vmatpush1.msra.mxu0 0.0
        %744 = vmatprep.subr.mxu0 0.0
        %745 = vmatpush1.msra.mxu0 0.0
        %746 = vmatprep.subr.mxu0 0.0
        %747 = vmatpush1.msra.mxu0 0.0
        %748 = vmatprep.subr.mxu0 0.0
        %749 = vmatpush1.msra.mxu0 0.0
        %750 = vmatprep.subr.mxu0 0.0
        %751 = vmatpush1.msra.mxu0 0.0
        %752 = vmatprep.subr.mxu0 0.0
        %753 = vmatpush1.msra.mxu0 0.0
        %754 = vmatprep.subr.mxu0 0.0
        %755 = vmatpush1.msra.mxu0 0.0
        %756 = vmatprep.subr.mxu0 0.0
        %757 = vmatpush1.msra.mxu0 0.0
        %758 = vmatprep.subr.mxu0 0.0
        %759 = vmatpush1.msra.mxu0 0.0
        %760 = vmatprep.subr.mxu0 0.0
        %761 = vmatpush1.msra.mxu0 0.0
        %762 = vmatprep.subr.mxu0 0.0
        %763 = vmatpush1.msra.mxu0 0.0
        %764 = vmatprep.subr.mxu0 0.0
        %765 = vmatpush1.msra.mxu0 0.0
        %766 = vmatprep.subr.mxu0 0.0
        %767 = vmatpush1.msra.mxu0 0.0
        %768 = vmatprep.subr.mxu0 0.0
        %769 = vmatpush1.msra.mxu0 0.0
        %770 = vmatprep.subr.mxu0 0.0
        %771 = vmatpush1.msra.mxu0 0.0
        %772 = vmatprep.subr.mxu0 0.0
        %773 = vmatpush1.msra.mxu0 0.0
        %774 = vmatprep.mubr.f32.mxu0 0.0
        %775 = vmatmul.mubr.f32.gmra.mrb[0].mxu0 %v699
        %v776 = vpop.f32.mrb[0].mxu0
        %v777 = vadd.f32 %v681, %v776
        %v778 = vpop.f32.mrb[0].mxu0
        %v779 = vadd.f32 %v681, %v778
        %780 = vmatprep.mubr.f32.mxu0 0.0
        %781 = vmatmul.mubr.f32.gmra.mrb[0].mxu0 %v702
        %v782 = vpop.f32.mrb[0].mxu0
        %v783 = vadd.f32 %v686, %v782
        %v784 = vpop.f32.mrb[0].mxu0
        %v785 = vadd.f32 %v686, %v784
        %786 = vmatprep.mubr.f32.mxu0 0.0
        %787 = vmatmul.mubr.f32.gmra.mrb[0].mxu0 %v705
        %v788 = vpop.f32.mrb[0].mxu0
        %v789 = vadd.f32 %v691, %v788
        %v790 = vpop.f32.mrb[0].mxu0
        %v791 = vadd.f32 %v691, %v790
        %792 = vmatprep.mubr.f32.mxu0 0.0
        %793 = vmatmul.mubr.f32.gmra.mrb[0].mxu0 %v708
        %v794 = vpop.f32.mrb[0].mxu0
        %v795 = vadd.f32 %v696, %v794
        %v796 = vpop.f32.mrb[0].mxu0
        %v797 = vadd.f32 %v696, %v796
        %798 = vdwg.mxu0
        %v799 = vtanh.pop %v777
        %v800 = vtanh.pop %v779
        %v801 = vtanh.pop %v783
        %v802 = vtanh.pop %v785
        %v803 = vtanh.pop %v789
        %v804 = vtanh.pop %v791
        %v805 = vtanh.pop %v795
        %v806 = vtanh.pop %v797
        %v807 = vld [vmem:[%s7] sm:$0xff]
        %v808 = vld [vmem:[%s7 + $0x8] sm:$0xff]
        %v809 = vld [vmem:[%s7 + $0x10] sm:$0xff]
        %v810 = vld [vmem:[%s7 + $0x18] sm:$0xff]
        %v811 = vld [vmem:[%s8] sm:$0xff]
        %v812 = vld [vmem:[%s8 + $0x8] sm:$0xff]
        %v813 = vld [vmem:[%s8 + $0x10] sm:$0xff]
        %v814 = vld [vmem:[%s8 + $0x18] sm:$0xff]
        %816 = vset.pattern.permute.xlu0 0
        %817 = vperm.xlu0 %816, %v811
        %v818 = vpop.permute.xlu0 %817
        %821 = vset.pattern.permute.xlu0 0
        %822 = vperm.xlu0 %821, %v812
        %v823 = vpop.permute.xlu0 %822
        %826 = vset.pattern.permute.xlu0 0
        %827 = vperm.xlu0 %826, %v813
        %v828 = vpop.permute.xlu0 %827
        %831 = vset.pattern.permute.xlu0 0
        %832 = vperm.xlu0 %831, %v814
        %v833 = vpop.permute.xlu0 %832
        %v836 = vsel %vm560, %v807, 0
        %v839 = vsel %vm560, %v808, 0
        %v842 = vsel %vm560, %v809, 0
        %v845 = vsel %vm560, %v810, 0
        %847 = vmatprep.subr.mxu0 %v800
        %848 = vmatpush1.msra.mxu0 %v799
        %849 = vmatprep.subr.mxu0 %v802
        %850 = vmatpush1.msra.mxu0 %v801
        %851 = vmatprep.subr.mxu0 %v804
        %852 = vmatpush1.msra.mxu0 %v803
        %853 = vmatprep.subr.mxu0 %v806
        %854 = vmatpush1.msra.mxu0 %v805
        %855 = vmatprep.subr.mxu0 0.0
        %856 = vmatpush1.msra.mxu0 0.0
        %857 = vmatprep.subr.mxu0 0.0
        %858 = vmatpush1.msra.mxu0 0.0
        %859 = vmatprep.subr.mxu0 0.0
        %860 = vmatpush1.msra.mxu0 0.0
        %861 = vmatprep.subr.mxu0 0.0
        %862 = vmatpush1.msra.mxu0 0.0
        %863 = vmatprep.subr.mxu0 0.0
        %864 = vmatpush1.msra.mxu0 0.0
        %865 = vmatprep.subr.mxu0 0.0
        %866 = vmatpush1.msra.mxu0 0.0
        %867 = vmatprep.subr.mxu0 0.0
        %868 = vmatpush1.msra.mxu0 0.0
        %869 = vmatprep.subr.mxu0 0.0
        %870 = vmatpush1.msra.mxu0 0.0
        %871 = vmatprep.subr.mxu0 0.0
        %872 = vmatpush1.msra.mxu0 0.0
        %873 = vmatprep.subr.mxu0 0.0
        %874 = vmatpush1.msra.mxu0 0.0
        %875 = vmatprep.subr.mxu0 0.0
        %876 = vmatpush1.msra.mxu0 0.0
        %877 = vmatprep.subr.mxu0 0.0
        %878 = vmatpush1.msra.mxu0 0.0
        %879 = vmatprep.subr.mxu0 0.0
        %880 = vmatpush1.msra.mxu0 0.0
        %881 = vmatprep.subr.mxu0 0.0
        %882 = vmatpush1.msra.mxu0 0.0
        %883 = vmatprep.subr.mxu0 0.0
        %884 = vmatpush1.msra.mxu0 0.0
        %885 = vmatprep.subr.mxu0 0.0
        %886 = vmatpush1.msra.mxu0 0.0
        %887 = vmatprep.subr.mxu0 0.0
        %888 = vmatpush1.msra.mxu0 0.0
        %889 = vmatprep.subr.mxu0 0.0
        %890 = vmatpush1.msra.mxu0 0.0
        %891 = vmatprep.subr.mxu0 0.0
        %892 = vmatpush1.msra.mxu0 0.0
        %893 = vmatprep.subr.mxu0 0.0
        %894 = vmatpush1.msra.mxu0 0.0
        %895 = vmatprep.subr.mxu0 0.0
        %896 = vmatpush1.msra.mxu0 0.0
        %897 = vmatprep.subr.mxu0 0.0
        %898 = vmatpush1.msra.mxu0 0.0
        %899 = vmatprep.subr.mxu0 0.0
        %900 = vmatpush1.msra.mxu0 0.0
        %901 = vmatprep.subr.mxu0 0.0
        %902 = vmatpush1.msra.mxu0 0.0
        %903 = vmatprep.subr.mxu0 0.0
        %904 = vmatpush1.msra.mxu0 0.0
        %905 = vmatprep.subr.mxu0 0.0
        %906 = vmatpush1.msra.mxu0 0.0
        %907 = vmatprep.subr.mxu0 0.0
        %908 = vmatpush1.msra.mxu0 0.0
        %909 = vmatprep.subr.mxu0 0.0
        %910 = vmatpush1.msra.mxu0 0.0
        %911 = vmatprep.mubr.f32.mxu0 0.0
        %912 = vmatmul.mubr.f32.gmra.mrb[0].mxu0 %v836
        %v913 = vpop.f32.mrb[0].mxu0
        %v914 = vadd.f32 %v818, %v913
        %v915 = vpop.f32.mrb[0].mxu0
        %v916 = vadd.f32 %v818, %v915
        %917 = vmatprep.mubr.f32.mxu0 0.0
        %918 = vmatmul.mubr.f32.gmra.mrb[0].mxu0 %v839
        %v919 = vpop.f32.mrb[0].mxu0
        %v920 = vadd.f32 %v823, %v919
        %v921 = vpop.f32.mrb[0].mxu0
        %v922 = vadd.f32 %v823, %v921
        %923 = vmatprep.mubr.f32.mxu0 0.0
        %924 = vmatmul.mubr.f32.gmra.mrb[0].mxu0 %v842
        %v925 = vpop.f32.mrb[0].mxu0
        %v926 = vadd.f32 %v828, %v925
        %v927 = vpop.f32.mrb[0].mxu0
        %v928 = vadd.f32 %v828, %v927
        %929 = vmatprep.mubr.f32.mxu0 0.0
        %930 = vmatmul.mubr.f32.gmra.mrb[0].mxu0 %v845
        %v931 = vpop.f32.mrb[0].mxu0
        %v932 = vadd.f32 %v833, %v931
        %v933 = vpop.f32.mrb[0].mxu0
        %v934 = vadd.f32 %v833, %v933
        %935 = vdwg.mxu0
        %v936 = vtanh.pop %v914
        %v937 = vtanh.pop %v916
        %v938 = vtanh.pop %v920
        %v939 = vtanh.pop %v922
        %v940 = vtanh.pop %v926
        %v941 = vtanh.pop %v928
        %v942 = vtanh.pop %v932
        %v943 = vtanh.pop %v934
        %v944 = vld [vmem:[%s9] sm:$0x1]
        %v945 = vld [vmem:[#allocation2] sm:$0x1]
        %947 = vset.pattern.permute.xlu0 0
        %948 = vperm.xlu0 %947, %v945
        %v949 = vpop.permute.xlu0 %948
        %v951 = vlaneseq
        %v952 = vshrl.u32 %v951, 7
        %v953 = vsub.s32 0, %v952
        %v954 = vrot.slane %v949, %v953
        %v956 = vsel %vm560, %v944, 0
        %958 = vmatprep.subr.mxu0 %v937
        %959 = vmatpush1.msra.mxu0 %v936
        %960 = vmatprep.subr.mxu0 %v939
        %961 = vmatpush1.msra.mxu0 %v938
        %962 = vmatprep.subr.mxu0 %v941
        %963 = vmatpush1.msra.mxu0 %v940
        %964 = vmatprep.subr.mxu0 %v943
        %965 = vmatpush1.msra.mxu0 %v942
        %966 = vmatprep.subr.mxu0 0.0
        %967 = vmatpush1.msra.mxu0 0.0
        %968 = vmatprep.subr.mxu0 0.0
        %969 = vmatpush1.msra.mxu0 0.0
        %970 = vmatprep.subr.mxu0 0.0
        %971 = vmatpush1.msra.mxu0 0.0
        %972 = vmatprep.subr.mxu0 0.0
        %973 = vmatpush1.msra.mxu0 0.0
        %974 = vmatprep.subr.mxu0 0.0
        %975 = vmatpush1.msra.mxu0 0.0
        %976 = vmatprep.subr.mxu0 0.0
        %977 = vmatpush1.msra.mxu0 0.0
        %978 = vmatprep.subr.mxu0 0.0
        %979 = vmatpush1.msra.mxu0 0.0
        %980 = vmatprep.subr.mxu0 0.0
        %981 = vmatpush1.msra.mxu0 0.0
        %982 = vmatprep.subr.mxu0 0.0
        %983 = vmatpush1.msra.mxu0 0.0
        %984 = vmatprep.subr.mxu0 0.0
        %985 = vmatpush1.msra.mxu0 0.0
        %986 = vmatprep.subr.mxu0 0.0
        %987 = vmatpush1.msra.mxu0 0.0
        %988 = vmatprep.subr.mxu0 0.0
        %989 = vmatpush1.msra.mxu0 0.0
        %990 = vmatprep.subr.mxu0 0.0
        %991 = vmatpush1.msra.mxu0 0.0
        %992 = vmatprep.subr.mxu0 0.0
        %993 = vmatpush1.msra.mxu0 0.0
        %994 = vmatprep.subr.mxu0 0.0
        %995 = vmatpush1.msra.mxu0 0.0
        %996 = vmatprep.subr.mxu0 0.0
        %997 = vmatpush1.msra.mxu0 0.0
        %998 = vmatprep.subr.mxu0 0.0
        %999 = vmatpush1.msra.mxu0 0.0
        %1000 = vmatprep.subr.mxu0 0.0
        %1001 = vmatpush1.msra.mxu0 0.0
        %1002 = vmatprep.subr.mxu0 0.0
        %1003 = vmatpush1.msra.mxu0 0.0
        %1004 = vmatprep.subr.mxu0 0.0
        %1005 = vmatpush1.msra.mxu0 0.0
        %1006 = vmatprep.subr.mxu0 0.0
        %1007 = vmatpush1.msra.mxu0 0.0
        %1008 = vmatprep.subr.mxu0 0.0
        %1009 = vmatpush1.msra.mxu0 0.0
        %1010 = vmatprep.subr.mxu0 0.0
        %1011 = vmatpush1.msra.mxu0 0.0
        %1012 = vmatprep.subr.mxu0 0.0
        %1013 = vmatpush1.msra.mxu0 0.0
        %1014 = vmatprep.subr.mxu0 0.0
        %1015 = vmatpush1.msra.mxu0 0.0
        %1016 = vmatprep.subr.mxu0 0.0
        %1017 = vmatpush1.msra.mxu0 0.0
        %1018 = vmatprep.subr.mxu0 0.0
        %1019 = vmatpush1.msra.mxu0 0.0
        %1020 = vmatprep.subr.mxu0 0.0
        %1021 = vmatpush1.msra.mxu0 0.0
        %1022 = vmatprep.mubr.f32.mxu0 0.0
        %1023 = vmatmul.mubr.f32.gmra.mrb[0].mxu0 %v956
        %v1024 = vpop.f32.mrb[0].mxu0
        %v1025 = vadd.f32 %v954, %v1024
        %v1026 = vpop.f32.mrb[0].mxu0
        %v1027 = vadd.f32 %v954, %v1026
        %1028 = vdwg.mxu0
        %v1031 = vcombine.low %v1025, %v1027
        %v1033 = vunpack.c.l.s4 1966171168
        %v1034 = vunpack.c.0.s8 %v1033
        %v1035 = vlaneseq
        %v1036 = vshrl.u32 %v1035, 7
        %v1037 = vsub.s32 %v1034, %v1036
        %v1038 = vrot.slane %v1031, %v1037
        %v1040 = vunpack.c.l.s4 1966171168
        %v1041 = vunpack.c.0.s8 %v1040
        %v1042 = vlaneseq
        %v1043 = vshrl.u32 %v1042, 7
        %v1044 = vsub.s32 %v1041, %v1043
        %v1045 = vrot.slane %v1038, %v1044
        %v1047 = vlaneseq
        %vm1048 = vcmp.ge.s32.totalorder %v1047, 0
        %vm1049 = vcmp.lt.s32.totalorder %v1047, 256
        %vm1050 = vmand %vm1048, %vm1049
        %1051 = vst.msk [vmem:[%s382] sm:$0x3] %vm1050, %v1045
        %s1052 = sand.u32 %s271, 1
        %s1053 = scalar_lea.sflag [#allocation4], %s1052
        %s1054 = sand.u32 %s271, 1
        %s1055 = smul.addr %s1054, 2
        %s1056 = scalar_lea.vmem [#allocation3], %s1055
        // Predicated region
        $region65: #{tpu_custom_call.1} parent=63 // pred_check
          %p1057 = pneg %p281
        $region66: #{tpu_custom_call.1} parent=63 // pred_check_branch
          %1059 = sbr.rel (%p1057) target = $region68
        $region67: #{tpu_custom_call.1} parent=63 // pred_region
          %s1060 = smul.u32 2, %s27
          %s1062 = ssub.s32 32, 32
          %1063 = vsyncadd %s1053, %s1062
          %s1064 = smul.addr %s1060, 16
          %s1065 = scalar_lea.hbm %s11, %s1064
          %s1067 = sshll.u32 %s1056, 4
          %s1068 = int_to_ptr.vmem [resolvable:$true] %s1067
          %1070 = dma.vmem_to_hbm [thread:$0]  %s1068, 32, %s1065, %s1053
        $region68: #{tpu_custom_call.1} parent=63 // pred_fallthru
          _
      $region64: #{tpu_custom_call.1} parent=5 // pred_fallthru
        _
      %p1071 = scmp.le.s32.totalorder 2, %s22
      // Predicated region
      $region69: #{tpu_custom_call.1} parent=5 // pred_check
        %p1072 = pneg %p1071
      $region70: #{tpu_custom_call.1} parent=5 // pred_check_branch
        %1074 = sbr.rel (%p1072) target = $region72
      $region71: #{tpu_custom_call.1} parent=5 // pred_region
        %s1075 = ssub.s32 %s22, 2
        // Predicated region
        $region73: #{tpu_custom_call.1} parent=71 // pred_check
          %p1076 = pneg %p287
        $region74: #{tpu_custom_call.1} parent=71 // pred_check_branch
          %1078 = sbr.rel (%p1076) target = $region76
        $region75: #{tpu_custom_call.1} parent=71 // pred_region
          %s1079 = sand.u32 %s272, 1
          %s1080 = scalar_lea.sflag [#allocation4], %s1079
          %s1081 = sand.u32 %s272, 1
          %s1082 = smul.addr %s1081, 2
          %s1083 = scalar_lea.vmem [#allocation3], %s1082
          %1084 = dma.done %s1080, 32
        $region76: #{tpu_custom_call.1} parent=71 // pred_fallthru
          _
      $region72: #{tpu_custom_call.1} parent=5 // pred_fallthru
        _
    $region6: #{tpu_custom_call.1} parent=1 // loop_footer
      %s26 = sadd.s32 1, %s22
    $region7: #{tpu_custom_call.1} parent=1 // loop_footer_branch
      %21 = sbr.rel target = $region3
    $region8: #{tpu_custom_call.1} parent=1 // loop_exit
      _
    %1085 = vsyncpa [#allocation4], 1
    %s1086 = scalar_lea.sflag [#allocation4], 1
    %1087 = vsyncpa %s1086, 1

</llo_original>
